<compile_context>
chip_gen: v5e
topology: v5e:2x2
jax: 0.10.0
libtpu: 0.0.40
codegen_flags: <defaults>
</compile_context>

<pallas_src>
import functools

import numpy as np
import jax
import jax.numpy as jnp
from jax.experimental import pallas as pl
from jax.experimental.pallas import tpu as pltpu

LANES = 128
NEG_FILL = -1.0e30


# ---------------------------------------------------------------------------
# In-kernel helpers
# ---------------------------------------------------------------------------
def _mm(a, b):
    return jnp.dot(a, b, preferred_element_type=jnp.float32)


def _mmpn_kernel(cfg, data_ref, s_ref, w_ref, out_ref):
    pooling = cfg["pooling"]
    N, B = cfg["N"], cfg["B"]
    P, deg = cfg["P"], cfg["deg"]
    Fn, Fg = cfg["Fn"], cfg["Fg"]

    def wv(name):                       # static slice view into the weight slab
        r0, h, w = cfg["woff"][name]
        return w_ref[r0:r0 + h, 0:w]

    def sv(name):                       # static slice view into the structure slab
        r0, h, w = cfg["soff"][name]
        return s_ref[r0:r0 + h, 0:w]

    def pool(v, rows, n_slabs):
        # Segment pooling over `n_slabs` contiguous row-slabs of height `rows`.
        # Host ordering places the d-th member of segment i at row d*rows + i,
        # so scatter_<max|min|mean> is a static-slice elementwise reduction.
        acc = v[0:rows, :]
        for d in range(1, n_slabs):
            blk = v[d * rows:(d + 1) * rows, :]
            if pooling == "mean":
                acc = acc + blk
            elif pooling == "min":
                acc = jnp.minimum(acc, blk)
            else:                        # 'max' (module default)
                acc = jnp.maximum(acc, blk)
        if pooling == "mean":
            acc = acc * (1.0 / n_slabs)
        return acc

    x = data_ref[0:N, 0:Fn]                                  # [N, Fn] (permuted order)
    g = data_ref[cfg["g_row"]:cfg["g_row"] + B, 0:Fg]        # [B, Fg]

    # ---- message_nn: project once per node/graph, gather per edge (one-hot matmuls).
    p_src = _mm(x, wv("wm_src"))                             # [N, Hm]
    p_tgt = _mm(x, wv("wm_tgt"))                             # [N, Hm]
    p_glb = _mm(g, wv("wm_glb")) + wv("bm")                  # [B, Hm] (bias folded)
    message = jnp.maximum(_mm(sv("gsrc"), p_src)
                          + _mm(sv("gtgt"), p_tgt)
                          + _mm(sv("e2g"), p_glb), 0.0)      # [E, Hm]

    # ---- scatter_<pool>(message, target_index): slot-major rows -> slab reduce.
    aggr = pool(message, N, deg)                             # [N, Hm]

    # ---- update_nn on cat([x, aggr, glob_per_node]).
    q_glb = _mm(g, wv("wu_glb")) + wv("bu")                  # [B, He] (bias folded)
    upd = jnp.maximum(_mm(x, wv("wu_x"))
                      + _mm(aggr, wv("wu_aggr"))
                      + _mm(sv("n2g"), q_glb), 0.0)          # [N, He]

    # ---- graph pooling (position-major rows) + to_global_nn (+ relu).
    agg_nodes = pool(upd, B, P)                              # [B, He]
    grp_emb = jnp.maximum(_mm(agg_nodes, wv("wg_nodes"))
                          + _mm(g, wv("wg_glb"))
                          + wv("bg"), 0.0)                   # [B, Hg]

    # ---- heads + softmax(cat([per_node.view(-1,3), group], 1)), lane-dense.
    per_node = _mm(upd, wv("we"))                            # [N, 1] (bias in ba_pad)
    logits = (_mm(sv("row_sel"), per_node * sv("col_sel"))   # pn logits -> cols [0,P)
              + _mm(grp_emb, wv("wa"))                       # grp logits -> cols [P,P+A)
              + wv("ba"))                                    # [B, 128]; pads = -1e30
    m = jnp.max(logits, axis=1, keepdims=True)
    e = jnp.exp(logits - m)                                  # padding exps to exactly 0
    inv = pl.reciprocal(jnp.sum(e, axis=1, keepdims=True), approx=False)
    out_ref[...] = e * inv                                   # single full-width store


# ---------------------------------------------------------------------------
# Host-side (one-time) slab packing
# ---------------------------------------------------------------------------
def pack_slab(named_blocks, lanes=LANES):
    """Stack 2-D f32 blocks into one [rows, lanes] slab; every block starts at
    an 8-row boundary, column 0.  Returns (slab, {name: (row0, h, w)})."""
    off, rows = {}, 0
    for name, arr in named_blocks:
        arr = np.asarray(arr, np.float32)
        assert arr.ndim == 2 and arr.shape[1] <= lanes, name
        off[name] = (rows, int(arr.shape[0]), int(arr.shape[1]))
        rows += int(-(-arr.shape[0] // 8) * 8)
    slab = np.zeros((max(rows, 8), lanes), np.float32)
    for name, arr in named_blocks:
        r0, h, w = off[name]
        slab[r0:r0 + h, :w] = np.asarray(arr, np.float32)
    return jnp.asarray(slab), off


def build_structure(edge_indices, batch_indices, num_nodes, num_edges,
                    nodes_per_graph=3):
    """Precompute the one-hot gather/select matrices and the row permutations
    that make both scatter pools contiguous-slab reductions."""
    src = np.asarray(edge_indices[0], np.int64)
    tgt = np.asarray(edge_indices[1], np.int64)
    batch = np.asarray(batch_indices, np.int64)
    num_nodes = np.asarray(num_nodes, np.int64)
    num_edges = np.asarray(num_edges, np.int64)

    N = int(batch.shape[0])
    B = int(num_nodes.shape[0])
    E = int(src.shape[0])
    P = int(nodes_per_graph)                       # result_per_node.view(-1, 3)
    assert N == P * B, "view(-1,3) requires 3 node-logits per graph"
    assert np.all(num_nodes == num_nodes[0]), "uniform nodes/graph required"
    indeg = np.bincount(tgt, minlength=N)
    assert np.all(indeg == indeg[0]) and indeg[0] >= 1, "uniform in-degree required"
    deg = int(indeg[0])
    assert E == deg * N

    # repeat_interleave graph assignment, in the ORIGINAL edge/node orders.
    edge_graph = np.repeat(np.arange(B), num_edges)
    node_graph = np.repeat(np.arange(B), num_nodes)

    # Position-major node permutation: new row p*B + b <- p-th node of graph b.
    pos_in_graph = np.zeros(N, np.int64)
    cnt = np.zeros(B, np.int64)
    for n in range(N):
        pos_in_graph[n] = cnt[batch[n]]
        cnt[batch[n]] += 1
    assert np.all(cnt == P)
    new_of_orig = pos_in_graph * B + batch
    orig_of_new = np.zeros(N, np.int64)
    orig_of_new[new_of_orig] = np.arange(N)
    assert np.all(batch[orig_of_new] == (np.arange(N) % B))

    # Slot-major edge ordering: edge row d*N + n_new is the d-th in-edge of
    # permuted node n_new.  All gathers are one-hot matmuls in the new orders.
    gsrc = np.zeros((E, N), np.float32)
    gtgt = np.zeros((E, N), np.float32)
    e2g = np.zeros((E, B), np.float32)
    fill = np.zeros(N, np.int64)
    for e in range(E):
        n_new = new_of_orig[tgt[e]]
        row = int(fill[n_new]) * N + int(n_new)
        fill[n_new] += 1
        gsrc[row, new_of_orig[src[e]]] = 1.0
        gtgt[row, n_new] = 1.0
        e2g[row, edge_graph[e]] = 1.0
    assert np.all(fill == deg)

    n2g = np.zeros((N, B), np.float32)
    n2g[np.arange(N), node_graph[orig_of_new]] = 1.0

    # result_per_node.view(-1, 3): view row i takes ORIGINAL nodes 3i..3i+2.
    row_sel = np.zeros((B, N), np.float32)
    col_sel = np.zeros((N, LANES), np.float32)     # padded to 128 lanes
    row_sel[orig_of_new // P, np.arange(N)] = 1.0
    col_sel[np.arange(N), orig_of_new % P] = 1.0

    s_slab, s_off = pack_slab([("gsrc", gsrc), ("gtgt", gtgt), ("e2g", e2g),
                               ("n2g", n2g), ("row_sel", row_sel),
                               ("col_sel", col_sel)])
    g_row = int(-(-N // 8) * 8)
    meta = {"N": N, "B": B, "E": E, "P": P, "deg": deg,
            "g_row": g_row, "data_rows": g_row + int(-(-B // 8) * 8),
            "orig_of_new": orig_of_new}
    return s_slab, s_off, meta


def init_linear(key, fan_in, fan_out):
    """PyTorch nn.Linear default init: U(-1/sqrt(fan_in), 1/sqrt(fan_in))."""
    bound = 1.0 / float(np.sqrt(fan_in))
    kw, kb = jax.random.split(key)
    w = jax.random.uniform(kw, (fan_out, fan_in), jnp.float32, -bound, bound)
    b = jax.random.uniform(kb, (fan_out,), jnp.float32, -bound, bound)
    return w, b


def init_raw_params(key, f_node, f_glob, h_msg, h_emb, h_grp, n_out_node, n_act):
    ks = jax.random.split(key, 5)
    return {
        "msg":  init_linear(ks[0], 2 * f_node + f_glob, h_msg),
        "upd":  init_linear(ks[1], h_msg + f_node + f_glob, h_emb),
        "glob": init_linear(ks[2], h_emb + f_glob, h_grp),
        "emb":  init_linear(ks[3], h_emb, n_out_node),
        "grp":  init_linear(ks[4], h_grp, n_act),
    }


def prepare_params(raw, f_node, f_glob, h_msg, h_emb, nodes_per_graph=3):
    """Transpose to [in, out], split along concat boundaries, pack everything
    into one 128-lane weight slab.  The group head (wa/ba) is pre-placed in
    output columns [P, P+n_act); the per-node head bias is folded into
    columns [0, P); padding columns of ba carry -1e30 for the fused softmax."""
    def T(w): return np.asarray(w, np.float32).T
    def b2(b): return np.asarray(b, np.float32).reshape(1, -1)

    wm, bm = raw["msg"]; wmt = T(wm)
    wu, bu = raw["upd"]; wut = T(wu)
    wg, bg = raw["glob"]; wgt = T(wg)
    we, be = raw["emb"]
    wa, ba = raw["grp"]
    n_act = int(np.asarray(wa).shape[0])
    h_grp = int(np.asarray(wa).shape[1])
    P = int(nodes_per_graph)
    assert P + n_act <= LANES

    wa_pad = np.zeros((h_grp, LANES), np.float32)
    wa_pad[:, P:P + n_act] = T(wa)
    ba_pad = np.full((1, LANES), NEG_FILL, np.float32)
    ba_pad[0, :P] = float(np.asarray(be, np.float32).reshape(-1)[0])
    ba_pad[0, P:P + n_act] = np.asarray(ba, np.float32).reshape(-1)

    blocks = [
        ("wm_src", wmt[:f_node]), ("wm_tgt", wmt[f_node:2 * f_node]),
        ("wm_glb", wmt[2 * f_node:]), ("bm", b2(bm)),
        ("wu_x", wut[:f_node]), ("wu_aggr", wut[f_node:f_node + h_msg]),
        ("wu_glb", wut[f_node + h_msg:]), ("bu", b2(bu)),
        ("wg_nodes", wgt[:h_emb]), ("wg_glb", wgt[h_emb:]), ("bg", b2(bg)),
        ("we", T(we)),
        ("wa", wa_pad), ("ba", ba_pad),
    ]
    w_slab, w_off = pack_slab(blocks)
    return w_slab, w_off, n_act


# ---------------------------------------------------------------------------
# Fused forward
# ---------------------------------------------------------------------------
def make_mmpn_forward(cfg, s_slab, w_slab):
    width = cfg["P"] + cfg["n_act"]
    vmem = pl.BlockSpec(memory_space=pltpu.MemorySpace.VMEM)
    call = pl.pallas_call(
        functools.partial(_mmpn_kernel, cfg),
        out_shape=jax.ShapeDtypeStruct((cfg["B"], LANES), jnp.float32),
        in_specs=[vmem, vmem, vmem],
        out_specs=vmem,
        compiler_params=pltpu.CompilerParams(vmem_limit_bytes=32 * 1024 * 1024),
    )
    perm = jnp.asarray(cfg["orig_of_new"], jnp.int32)
    N, B, Fn, Fg, g_row = cfg["N"], cfg["B"], cfg["Fn"], cfg["Fg"], cfg["g_row"]

    @jax.jit
    def fwd(s, w, x_nodes, global_attr):
        x = jnp.asarray(x_nodes, jnp.float32)[perm]       # position-major node order
        g = jnp.asarray(global_attr, jnp.float32)
        data = jnp.zeros((cfg["data_rows"], LANES), jnp.float32)
        data = data.at[0:N, 0:Fn].set(x)
        data = data.at[g_row:g_row + B, 0:Fg].set(g)
        return call(data, s, w)[:, :width]

    return functools.partial(fwd, s_slab, w_slab)


# ---------------------------------------------------------------------------
# Pure-JAX reference (mirrors the torch forward) for validation
# ---------------------------------------------------------------------------
def mmpn_reference(raw, x_nodes, global_attr, edge_indices, batch_indices,
                   num_nodes, num_edges, pooling="max"):
    src = jnp.asarray(np.asarray(edge_indices[0], np.int32))
    tgt = jnp.asarray(np.asarray(edge_indices[1], np.int32))
    batch = jnp.asarray(np.asarray(batch_indices, np.int32))
    n_nodes = x_nodes.shape[0]
    n_graphs = global_attr.shape[0]
    edge_graph = jnp.asarray(np.repeat(np.arange(n_graphs), np.asarray(num_edges)))
    node_graph = jnp.asarray(np.repeat(np.arange(n_graphs), np.asarray(num_nodes)))

    def lin(p, v):
        return jnp.dot(v, p[0].T, precision=jax.lax.Precision.HIGHEST) + p[1]

    def seg(vals, idx, num):
        if pooling == "max":
            return jax.ops.segment_max(vals, idx, num_segments=num)
        if pooling == "min":
            return jax.ops.segment_min(vals, idx, num_segments=num)
        s = jax.ops.segment_sum(vals, idx, num_segments=num)
        c = jax.ops.segment_sum(jnp.ones_like(vals[:, :1]), idx, num_segments=num)
        return s / jnp.maximum(c, 1.0)

    msg_in = jnp.concatenate(
        [x_nodes[src], x_nodes[tgt], global_attr[edge_graph]], axis=1)
    message = jax.nn.relu(lin(raw["msg"], msg_in))
    aggr = seg(message, tgt, n_nodes)
    upd_in = jnp.concatenate([x_nodes, aggr, global_attr[node_graph]], axis=1)
    upd = jax.nn.relu(lin(raw["upd"], upd_in))
    agg_nodes = seg(upd, batch, n_graphs)
    grp_emb = jax.nn.relu(
        lin(raw["glob"], jnp.concatenate([agg_nodes, global_attr], axis=1)))
    per_node = lin(raw["emb"], upd).reshape(-1, 3)
    grp = lin(raw["grp"], grp_emb)
    return jax.nn.softmax(jnp.concatenate([per_node, grp], axis=1), axis=1)


# ---------------------------------------------------------------------------
if __name__ == "__main__":
    # Hyper-params (message_arch='32', node_arch='32', n_embedding_group=16,
    # n_output_dim_node=1 with 3 nodes/graph => view(-1,3), n_output_dim_action=2).
    F_NODE, F_GLOB = 4, 3
    H_MSG, H_EMB, H_GRP = 32, 32, 16
    N_OUT_NODE, N_ACT = 1, 2
    N_GRAPHS, NODES_PER_G = 2, 3
    N_NODES = N_GRAPHS * NODES_PER_G

    # Edges: all ordered pairs inside each graph -> uniform in-degree 2.
    src_l, tgt_l = [], []
    for gi in range(N_GRAPHS):
        base = gi * NODES_PER_G
        for i in range(NODES_PER_G):
            for j in range(NODES_PER_G):
                if i != j:
                    src_l.append(base + i)
                    tgt_l.append(base + j)
    edge_indices = np.stack([np.array(src_l, np.int32), np.array(tgt_l, np.int32)])
    num_edges = np.full((N_GRAPHS,), NODES_PER_G * (NODES_PER_G - 1), np.int32)
    num_nodes = np.full((N_GRAPHS,), NODES_PER_G, np.int32)
    batch_indices = np.repeat(np.arange(N_GRAPHS), NODES_PER_G).astype(np.int32)

    key = jax.random.PRNGKey(0)
    k_par, k_nodes, k_glob = jax.random.split(key, 3)
    raw = init_raw_params(k_par, F_NODE, F_GLOB, H_MSG, H_EMB, H_GRP,
                          N_OUT_NODE, N_ACT)
    w_slab, w_off, n_act = prepare_params(raw, F_NODE, F_GLOB, H_MSG, H_EMB,
                                          nodes_per_graph=NODES_PER_G)
    s_slab, s_off, meta = build_structure(edge_indices, batch_indices,
                                          num_nodes, num_edges,
                                          nodes_per_graph=NODES_PER_G)

    x_nodes = jax.random.normal(k_nodes, (N_NODES, F_NODE), jnp.float32)
    global_attr = jax.random.normal(k_glob, (N_GRAPHS, F_GLOB), jnp.float32)

    base_cfg = dict(meta, Fn=F_NODE, Fg=F_GLOB, n_act=n_act,
                    woff=w_off, soff=s_off)

    ok = True
    for pooling in ("max", "mean"):       # 'max' is the module default
        cfg = dict(base_cfg, pooling=pooling)
        fwd = make_mmpn_forward(cfg, s_slab, w_slab)
        out = jax.block_until_ready(fwd(x_nodes, global_attr))
        ref = jax.block_until_ready(
            mmpn_reference(raw, x_nodes, global_attr, edge_indices,
                           batch_indices, num_nodes, num_edges, pooling=pooling))
        ok &= out.shape == (N_GRAPHS, NODES_PER_G + N_ACT)
        ok &= bool(jnp.all(jnp.isfinite(out)))
        ok &= bool(jnp.allclose(jnp.sum(out, axis=1), 1.0, atol=1e-5))
        ok &= bool(jnp.allclose(out, ref, atol=5e-3))

    assert ok, "mismatch vs pure-JAX reference"
    print("KERNEL_OK")
</pallas_src>

<mosaic_0001>
module attributes {stable_mosaic.version = 11 : i64} {
  func.func @_mmpn_kernel(%arg0: memref<16x128xf32, #tpu.memory_space<vmem>>, %arg1: memref<72x128xf32, #tpu.memory_space<vmem>>, %arg2: memref<192x128xf32, #tpu.memory_space<vmem>>, %arg3: memref<2x128xf32, #tpu.memory_space<vmem>>) attributes {dimension_semantics = [], scalar_prefetch = 0 : i64, scratch_operands = 0 : i64, tpu.core_type = #tpu.core_type<tc>} {
    %c0 = arith.constant 0 : index
    %c0_0 = arith.constant 0 : index
    %0 = vector.load %arg0[%c0, %c0_0] : memref<16x128xf32, #tpu.memory_space<vmem>>, vector<6x4xf32>
    %c8 = arith.constant 8 : index
    %c0_1 = arith.constant 0 : index
    %1 = vector.load %arg0[%c8, %c0_1] : memref<16x128xf32, #tpu.memory_space<vmem>>, vector<2x3xf32>
    %c0_2 = arith.constant 0 : index
    %c0_3 = arith.constant 0 : index
    %2 = vector.load %arg2[%c0_2, %c0_3] : memref<192x128xf32, #tpu.memory_space<vmem>>, vector<4x32xf32>
    %cst = arith.constant dense<0.000000e+00> : vector<6x32xf32>
    %3 = tpu.matmul %0, %2, %cst {dimension_numbers = #tpu.dot_dimension_numbers<[1], [0], [0], [1], [0, 0, 1, 1], [], []>} : vector<6x4xf32>, vector<4x32xf32>, vector<6x32xf32> -> vector<6x32xf32>
    %c8_4 = arith.constant 8 : index
    %c0_5 = arith.constant 0 : index
    %4 = vector.load %arg2[%c8_4, %c0_5] : memref<192x128xf32, #tpu.memory_space<vmem>>, vector<4x32xf32>
    %cst_6 = arith.constant dense<0.000000e+00> : vector<6x32xf32>
    %5 = tpu.matmul %0, %4, %cst_6 {dimension_numbers = #tpu.dot_dimension_numbers<[1], [0], [0], [1], [0, 0, 1, 1], [], []>} : vector<6x4xf32>, vector<4x32xf32>, vector<6x32xf32> -> vector<6x32xf32>
    %c16 = arith.constant 16 : index
    %c0_7 = arith.constant 0 : index
    %6 = vector.load %arg2[%c16, %c0_7] : memref<192x128xf32, #tpu.memory_space<vmem>>, vector<3x32xf32>
    %cst_8 = arith.constant dense<0.000000e+00> : vector<2x32xf32>
    %7 = tpu.matmul %1, %6, %cst_8 {dimension_numbers = #tpu.dot_dimension_numbers<[1], [0], [0], [1], [0, 0, 1, 1], [], []>} : vector<2x3xf32>, vector<3x32xf32>, vector<2x32xf32> -> vector<2x32xf32>
    %c24 = arith.constant 24 : index
    %c0_9 = arith.constant 0 : index
    %8 = vector.load %arg2[%c24, %c0_9] : memref<192x128xf32, #tpu.memory_space<vmem>>, vector<1x32xf32>
    %9 = vector.broadcast %8 : vector<1x32xf32> to vector<2x32xf32>
    %10 = arith.addf %7, %9 : vector<2x32xf32>
    %c0_10 = arith.constant 0 : index
    %c0_11 = arith.constant 0 : index
    %11 = vector.load %arg1[%c0_10, %c0_11] : memref<72x128xf32, #tpu.memory_space<vmem>>, vector<12x6xf32>
    %cst_12 = arith.constant dense<0.000000e+00> : vector<12x32xf32>
    %12 = tpu.matmul %11, %3, %cst_12 {dimension_numbers = #tpu.dot_dimension_numbers<[1], [0], [0], [1], [0, 0, 1, 1], [], []>} : vector<12x6xf32>, vector<6x32xf32>, vector<12x32xf32> -> vector<12x32xf32>
    %c16_13 = arith.constant 16 : index
    %c0_14 = arith.constant 0 : index
    %13 = vector.load %arg1[%c16_13, %c0_14] : memref<72x128xf32, #tpu.memory_space<vmem>>, vector<12x6xf32>
    %cst_15 = arith.constant dense<0.000000e+00> : vector<12x32xf32>
    %14 = tpu.matmul %13, %5, %cst_15 {dimension_numbers = #tpu.dot_dimension_numbers<[1], [0], [0], [1], [0, 0, 1, 1], [], []>} : vector<12x6xf32>, vector<6x32xf32>, vector<12x32xf32> -> vector<12x32xf32>
    %15 = arith.addf %12, %14 : vector<12x32xf32>
    %c32 = arith.constant 32 : index
    %c0_16 = arith.constant 0 : index
    %16 = vector.load %arg1[%c32, %c0_16] : memref<72x128xf32, #tpu.memory_space<vmem>>, vector<12x2xf32>
    %cst_17 = arith.constant dense<0.000000e+00> : vector<12x32xf32>
    %17 = tpu.matmul %16, %10, %cst_17 {dimension_numbers = #tpu.dot_dimension_numbers<[1], [0], [0], [1], [0, 0, 1, 1], [], []>} : vector<12x2xf32>, vector<2x32xf32>, vector<12x32xf32> -> vector<12x32xf32>
    %18 = arith.addf %15, %17 : vector<12x32xf32>
    %cst_18 = arith.constant 0.000000e+00 : f32
    %19 = vector.broadcast %cst_18 : f32 to vector<12x32xf32>
    %20 = arith.maximumf %18, %19 : vector<12x32xf32>
    %21 = vector.extract_strided_slice %20 {offsets = [0, 0], sizes = [6, 32], strides = [1, 1]} : vector<12x32xf32> to vector<6x32xf32>
    %22 = vector.extract_strided_slice %20 {offsets = [6, 0], sizes = [6, 32], strides = [1, 1]} : vector<12x32xf32> to vector<6x32xf32>
    %23 = arith.maximumf %21, %22 : vector<6x32xf32>
    %c72 = arith.constant 72 : index
    %c0_19 = arith.constant 0 : index
    %24 = vector.load %arg2[%c72, %c0_19] : memref<192x128xf32, #tpu.memory_space<vmem>>, vector<3x32xf32>
    %cst_20 = arith.constant dense<0.000000e+00> : vector<2x32xf32>
    %25 = tpu.matmul %1, %24, %cst_20 {dimension_numbers = #tpu.dot_dimension_numbers<[1], [0], [0], [1], [0, 0, 1, 1], [], []>} : vector<2x3xf32>, vector<3x32xf32>, vector<2x32xf32> -> vector<2x32xf32>
    %c80 = arith.constant 80 : index
    %c0_21 = arith.constant 0 : index
    %26 = vector.load %arg2[%c80, %c0_21] : memref<192x128xf32, #tpu.memory_space<vmem>>, vector<1x32xf32>
    %27 = vector.broadcast %26 : vector<1x32xf32> to vector<2x32xf32>
    %28 = arith.addf %25, %27 : vector<2x32xf32>
    %c32_22 = arith.constant 32 : index
    %c0_23 = arith.constant 0 : index
    %29 = vector.load %arg2[%c32_22, %c0_23] : memref<192x128xf32, #tpu.memory_space<vmem>>, vector<4x32xf32>
    %cst_24 = arith.constant dense<0.000000e+00> : vector<6x32xf32>
    %30 = tpu.matmul %0, %29, %cst_24 {dimension_numbers = #tpu.dot_dimension_numbers<[1], [0], [0], [1], [0, 0, 1, 1], [], []>} : vector<6x4xf32>, vector<4x32xf32>, vector<6x32xf32> -> vector<6x32xf32>
    %c40 = arith.constant 40 : index
    %c0_25 = arith.constant 0 : index
    %31 = vector.load %arg2[%c40, %c0_25] : memref<192x128xf32, #tpu.memory_space<vmem>>, vector<32x32xf32>
    %cst_26 = arith.constant dense<0.000000e+00> : vector<6x32xf32>
    %32 = tpu.matmul %23, %31, %cst_26 {dimension_numbers = #tpu.dot_dimension_numbers<[1], [0], [0], [1], [0, 0, 1, 1], [], []>} : vector<6x32xf32>, vector<32x32xf32>, vector<6x32xf32> -> vector<6x32xf32>
    %33 = arith.addf %30, %32 : vector<6x32xf32>
    %c48 = arith.constant 48 : index
    %c0_27 = arith.constant 0 : index
    %34 = vector.load %arg1[%c48, %c0_27] : memref<72x128xf32, #tpu.memory_space<vmem>>, vector<6x2xf32>
    %cst_28 = arith.constant dense<0.000000e+00> : vector<6x32xf32>
    %35 = tpu.matmul %34, %28, %cst_28 {dimension_numbers = #tpu.dot_dimension_numbers<[1], [0], [0], [1], [0, 0, 1, 1], [], []>} : vector<6x2xf32>, vector<2x32xf32>, vector<6x32xf32> -> vector<6x32xf32>
    %36 = arith.addf %33, %35 : vector<6x32xf32>
    %cst_29 = arith.constant 0.000000e+00 : f32
    %37 = vector.broadcast %cst_29 : f32 to vector<6x32xf32>
    %38 = arith.maximumf %36, %37 : vector<6x32xf32>
    %39 = vector.extract_strided_slice %38 {offsets = [0, 0], sizes = [2, 32], strides = [1, 1]} : vector<6x32xf32> to vector<2x32xf32>
    %40 = vector.extract_strided_slice %38 {offsets = [2, 0], sizes = [2, 32], strides = [1, 1]} : vector<6x32xf32> to vector<2x32xf32>
    %41 = arith.maximumf %39, %40 : vector<2x32xf32>
    %42 = vector.extract_strided_slice %38 {offsets = [4, 0], sizes = [2, 32], strides = [1, 1]} : vector<6x32xf32> to vector<2x32xf32>
    %43 = arith.maximumf %41, %42 : vector<2x32xf32>
    %c88 = arith.constant 88 : index
    %c0_30 = arith.constant 0 : index
    %44 = vector.load %arg2[%c88, %c0_30] : memref<192x128xf32, #tpu.memory_space<vmem>>, vector<32x16xf32>
    %cst_31 = arith.constant dense<0.000000e+00> : vector<2x16xf32>
    %45 = tpu.matmul %43, %44, %cst_31 {dimension_numbers = #tpu.dot_dimension_numbers<[1], [0], [0], [1], [0, 0, 1, 1], [], []>} : vector<2x32xf32>, vector<32x16xf32>, vector<2x16xf32> -> vector<2x16xf32>
    %c120 = arith.constant 120 : index
    %c0_32 = arith.constant 0 : index
    %46 = vector.load %arg2[%c120, %c0_32] : memref<192x128xf32, #tpu.memory_space<vmem>>, vector<3x16xf32>
    %cst_33 = arith.constant dense<0.000000e+00> : vector<2x16xf32>
    %47 = tpu.matmul %1, %46, %cst_33 {dimension_numbers = #tpu.dot_dimension_numbers<[1], [0], [0], [1], [0, 0, 1, 1], [], []>} : vector<2x3xf32>, vector<3x16xf32>, vector<2x16xf32> -> vector<2x16xf32>
    %48 = arith.addf %45, %47 : vector<2x16xf32>
    %c128 = arith.constant 128 : index
    %c0_34 = arith.constant 0 : index
    %49 = vector.load %arg2[%c128, %c0_34] : memref<192x128xf32, #tpu.memory_space<vmem>>, vector<1x16xf32>
    %50 = vector.broadcast %49 : vector<1x16xf32> to vector<2x16xf32>
    %51 = arith.addf %48, %50 : vector<2x16xf32>
    %cst_35 = arith.constant 0.000000e+00 : f32
    %52 = vector.broadcast %cst_35 : f32 to vector<2x16xf32>
    %53 = arith.maximumf %51, %52 : vector<2x16xf32>
    %c136 = arith.constant 136 : index
    %c0_36 = arith.constant 0 : index
    %54 = vector.load %arg2[%c136, %c0_36] : memref<192x128xf32, #tpu.memory_space<vmem>>, vector<32x1xf32>
    %cst_37 = arith.constant dense<0.000000e+00> : vector<6x1xf32>
    %55 = tpu.matmul %38, %54, %cst_37 {dimension_numbers = #tpu.dot_dimension_numbers<[1], [0], [0], [1], [0, 0, 1, 1], [], []>} : vector<6x32xf32>, vector<32x1xf32>, vector<6x1xf32> -> vector<6x1xf32>
    %c56 = arith.constant 56 : index
    %c0_38 = arith.constant 0 : index
    %56 = vector.load %arg1[%c56, %c0_38] : memref<72x128xf32, #tpu.memory_space<vmem>>, vector<2x6xf32>
    %c64 = arith.constant 64 : index
    %c0_39 = arith.constant 0 : index
    %57 = vector.load %arg1[%c64, %c0_39] : memref<72x128xf32, #tpu.memory_space<vmem>>, vector<6x128xf32>
    %58 = vector.broadcast %55 : vector<6x1xf32> to vector<6x128xf32>
    %59 = arith.mulf %58, %57 : vector<6x128xf32>
    %cst_40 = arith.constant dense<0.000000e+00> : vector<2x128xf32>
    %60 = tpu.matmul %56, %59, %cst_40 {dimension_numbers = #tpu.dot_dimension_numbers<[1], [0], [0], [1], [0, 0, 1, 1], [], []>} : vector<2x6xf32>, vector<6x128xf32>, vector<2x128xf32> -> vector<2x128xf32>
    %c168 = arith.constant 168 : index
    %c0_41 = arith.constant 0 : index
    %61 = vector.load %arg2[%c168, %c0_41] : memref<192x128xf32, #tpu.memory_space<vmem>>, vector<16x128xf32>
    %cst_42 = arith.constant dense<0.000000e+00> : vector<2x128xf32>
    %62 = tpu.matmul %53, %61, %cst_42 {dimension_numbers = #tpu.dot_dimension_numbers<[1], [0], [0], [1], [0, 0, 1, 1], [], []>} : vector<2x16xf32>, vector<16x128xf32>, vector<2x128xf32> -> vector<2x128xf32>
    %63 = arith.addf %60, %62 : vector<2x128xf32>
    %c184 = arith.constant 184 : index
    %c0_43 = arith.constant 0 : index
    %64 = vector.load %arg2[%c184, %c0_43] : memref<192x128xf32, #tpu.memory_space<vmem>>, vector<1x128xf32>
    %65 = vector.broadcast %64 : vector<1x128xf32> to vector<2x128xf32>
    %66 = arith.addf %63, %65 : vector<2x128xf32>
    %cst_44 = arith.constant dense<0xFF800000> : vector<2xf32>
    %67 = vector.multi_reduction <maximumf>, %66, %cst_44 [1] : vector<2x128xf32> to vector<2xf32>
    %68 = vector.shape_cast %67 : vector<2xf32> to vector<2x1xf32>
    %69 = vector.broadcast %68 : vector<2x1xf32> to vector<2x128xf32>
    %70 = arith.subf %66, %69 : vector<2x128xf32>
    %71 = math.exp %70 : vector<2x128xf32>
    %cst_45 = arith.constant dense<0.000000e+00> : vector<2xf32>
    %72 = vector.multi_reduction <add>, %71, %cst_45 [1] : vector<2x128xf32> to vector<2xf32>
    %73 = vector.shape_cast %72 : vector<2xf32> to vector<2x1xf32>
    %74 = tpu.reciprocal %73 : vector<2x1xf32> -> vector<2x1xf32>
    %75 = vector.broadcast %74 : vector<2x1xf32> to vector<2x128xf32>
    %76 = arith.mulf %71, %75 : vector<2x128xf32>
    %c0_46 = arith.constant 0 : index
    %c0_47 = arith.constant 0 : index
    %77 = vector.load %arg3[%c0_46, %c0_47] : memref<2x128xf32, #tpu.memory_space<vmem>>, vector<2x128xf32>
    tpu.vector_store %arg3[%c0_46, %c0_47], %76 {strides = array<i32>} : memref<2x128xf32, #tpu.memory_space<vmem>>, vector<2x128xf32>,
    return
  }
}

</mosaic_0001>

<llo_original>
// kernel: fwd.1
$region0: #{fwd.1}
  #allocation0 [shape = 'u32[]', space=smem, size = 0x4, offset = 0x4, fixed_abs, tag = 'smem constant byte address 0x4 - core index']
  #allocation1 [shape = 'u32[72,128]{1,0:T(1,128)}', space=vmem, size = 0x9000, scoped, tag = 'internal scratch']
  %s0 = inlined_call_operand.vmem [shape: f32[16,128], index: 0, kind: input, shape index: {}]
  %s1 = inlined_call_operand.vmem [shape: f32[72,128], index: 1, kind: input, shape index: {}]
  %s2 = inlined_call_operand.hbm [shape: f32[192,128], index: 2, kind: input, shape index: {}]
  %s3 = inlined_call_operand.hbm [shape: f32[2,128], index: 3, kind: output, shape index: {}]
  %s4 = sld [smem:[#allocation0]]
  $region26: #{fwd.1} parent=0
    _
  %s6 = ssub.s32 1, %s4
  %s7 = scalar_select 0, %s6, %s4
  $region1: #{fwd.1} parent=0
    #allocation2 [shape = 'u8[98304]{0}', space=vmem, size = 0x18000, scoped, tag = 'input window, operand 2, single buffered']
    #allocation3 [shape = 's32[1]{0}', space=sflag, size = 0x4, scoped, tag = 'scoped memory for fwd.1']
    #allocation4 [shape = 's32[1]{0}', space=sflag, size = 0x4, scoped, tag = 'scoped memory for fwd.1']
    #allocation5 [shape = 'u8[1024]{0}', space=vmem, size = 0x400, scoped, tag = 'output window, operand 0, single buffered']
    %8 = vsyncpa [#allocation3], 0
    %9 = vsyncpa [#allocation4], 0
    // Predicated region
    $region2: #{fwd.1} parent=1 // pred_check
      _
    $region3: #{fwd.1} parent=1 // pred_check_branch
      %11 = sbr.rel (0) target = $region5
    $region4: #{fwd.1} parent=1 // pred_region
      _
    $region5: #{fwd.1} parent=1 // pred_fallthru
      _
    // Predicated region
    $region6: #{fwd.1} parent=1 // pred_check
      _
    $region7: #{fwd.1} parent=1 // pred_check_branch
      %13 = sbr.rel (0) target = $region9
    $region8: #{fwd.1} parent=1 // pred_region
      _
    $region9: #{fwd.1} parent=1 // pred_fallthru
      _
    // Predicated region
    $region10: #{fwd.1} parent=1 // pred_check
      _
    $region11: #{fwd.1} parent=1 // pred_check_branch
      %15 = sbr.rel (0) target = $region13
    $region12: #{fwd.1} parent=1 // pred_region
      %17 = vsyncadd [#allocation3], 0
      %s18 = sshll.u32 %s2, 4
      %s19 = int_to_ptr.hbm [resolvable:$true] %s18
      %s20 = sshll.u32 [#allocation2], 4
      %s21 = int_to_ptr.vmem [resolvable:$true] %s20
      %26 = dma.hbm_to_vmem [thread:$0]  %s19, 3072, %s21, [#allocation3], 128, 128, 8
    $region13: #{fwd.1} parent=1 // pred_fallthru
      _
    // Predicated region
    $region14: #{fwd.1} parent=1 // pred_check
      _
    $region15: #{fwd.1} parent=1 // pred_check_branch
      %28 = sbr.rel (0) target = $region17
    $region16: #{fwd.1} parent=1 // pred_region
      %30 = dma.done [#allocation3], 3072
    $region17: #{fwd.1} parent=1 // pred_fallthru
      _
    %v31 = vld [vmem:[%s0] sm:$0x3f]
    %v32 = vld [vmem:[%s0 + $0x8] sm:$0x3]
    %v33 = vld [vmem:[#allocation2] sm:$0xf]
    %vm34 = vcmask 31744
    %v36 = vsel %vm34, %v31, 0
    %vm38 = vcmask 1043456
    %v40 = vsel %vm38, %v33, 0
    %42 = vmatpush.msra.mxu0 0.0
    %43 = vmatpush.msra.mxu0 0.0
    %44 = vmatpush.msra.mxu0 0.0
    %45 = vmatpush.msra.mxu0 0.0
    %46 = vmatpush.msra.mxu0 0.0
    %47 = vmatpush.msra.mxu0 0.0
    %48 = vmatpush.msra.mxu0 0.0
    %49 = vmatpush.msra.mxu0 0.0
    %50 = vmatpush.msra.mxu0 0.0
    %51 = vmatpush.msra.mxu0 0.0
    %52 = vmatpush.msra.mxu0 0.0
    %53 = vmatpush.msra.mxu0 0.0
    %54 = vmatpush.msra.mxu0 0.0
    %55 = vmatpush.msra.mxu0 0.0
    %56 = vmatpush.msra.mxu0 0.0
    %57 = vmatpush.msra.mxu0 %v40
    %58 = vmatmul.f32.gmra.mxu0 %v36
    %v59 = vpop.f32.mrf.mxu0
    %v60 = vadd.f32 0.0, %v59
    %61 = vdwg.mxu0
    %v62 = vld [vmem:[#allocation2 + $0x8] sm:$0xf]
    %v64 = vsel %vm38, %v62, 0
    %66 = vmatpush.msra.mxu0 0.0
    %67 = vmatpush.msra.mxu0 0.0
    %68 = vmatpush.msra.mxu0 0.0
    %69 = vmatpush.msra.mxu0 0.0
    %70 = vmatpush.msra.mxu0 0.0
    %71 = vmatpush.msra.mxu0 0.0
    %72 = vmatpush.msra.mxu0 0.0
    %73 = vmatpush.msra.mxu0 0.0
    %74 = vmatpush.msra.mxu0 0.0
    %75 = vmatpush.msra.mxu0 0.0
    %76 = vmatpush.msra.mxu0 0.0
    %77 = vmatpush.msra.mxu0 0.0
    %78 = vmatpush.msra.mxu0 0.0
    %79 = vmatpush.msra.mxu0 0.0
    %80 = vmatpush.msra.mxu0 0.0
    %81 = vmatpush.msra.mxu0 %v64
    %82 = vmatmul.f32.gmra.mxu0 %v36
    %v83 = vpop.f32.mrf.mxu0
    %v84 = vadd.f32 0.0, %v83
    %85 = vdwg.mxu0
    %v86 = vld [vmem:[#allocation2 + $0x10] sm:$0x7]
    %v87 = vld [vmem:[#allocation2 + $0x18] sm:$0x1]
    %v88 = vperm.slane %v87, 0
    %vm89 = vcmask 23552
    %v91 = vsel %vm89, %v32, 0
    %vm93 = vcmask 1042432
    %v95 = vsel %vm93, %v86, 0
    %97 = vmatpush.msra.mxu0 0.0
    %98 = vmatpush.msra.mxu0 0.0
    %99 = vmatpush.msra.mxu0 0.0
    %100 = vmatpush.msra.mxu0 0.0
    %101 = vmatpush.msra.mxu0 0.0
    %102 = vmatpush.msra.mxu0 0.0
    %103 = vmatpush.msra.mxu0 0.0
    %104 = vmatpush.msra.mxu0 0.0
    %105 = vmatpush.msra.mxu0 0.0
    %106 = vmatpush.msra.mxu0 0.0
    %107 = vmatpush.msra.mxu0 0.0
    %108 = vmatpush.msra.mxu0 0.0
    %109 = vmatpush.msra.mxu0 0.0
    %110 = vmatpush.msra.mxu0 0.0
    %111 = vmatpush.msra.mxu0 0.0
    %112 = vmatpush.msra.mxu0 %v95
    %113 = vmatmul.f32.gmra.mxu0 %v91
    %v114 = vpop.f32.mrf.mxu0
    %v115 = vadd.f32 %v88, %v114
    %116 = vdwg.mxu0
    %v117 = vld [vmem:[%s1] sm:$0xff]
    %v118 = vld [vmem:[%s1 + $0x8] sm:$0xf]
    %v119 = vld [vmem:[%s1 + $0x10] sm:$0xff]
    %v120 = vld [vmem:[%s1 + $0x18] sm:$0xf]
    %vm121 = vcmask 48128
    %v123 = vsel %vm121, %v119, 0
    %v126 = vsel %vm121, %v120, 0
    %vm128 = vcmask 1045504
    %v130 = vsel %vm128, %v84, 0
    %132 = vmatpush.msra.mxu0 0.0
    %133 = vmatpush.msra.mxu0 0.0
    %134 = vmatpush.msra.mxu0 0.0
    %135 = vmatpush.msra.mxu0 0.0
    %136 = vmatpush.msra.mxu0 0.0
    %137 = vmatpush.msra.mxu0 0.0
    %138 = vmatpush.msra.mxu0 0.0
    %139 = vmatpush.msra.mxu0 0.0
    %140 = vmatpush.msra.mxu0 0.0
    %141 = vmatpush.msra.mxu0 0.0
    %142 = vmatpush.msra.mxu0 0.0
    %143 = vmatpush.msra.mxu0 0.0
    %144 = vmatpush.msra.mxu0 0.0
    %145 = vmatpush.msra.mxu0 0.0
    %146 = vmatpush.msra.mxu0 0.0
    %147 = vmatpush.msra.mxu0 %v130
    %148 = vmatmul.f32.gmra.mxu0 %v123
    %v149 = vpop.f32.mrf.mxu0
    %v150 = vadd.f32 0.0, %v149
    %151 = vmatmul.f32.gmra.mxu0 %v126
    %v152 = vpop.f32.mrf.mxu0
    %v153 = vadd.f32 0.0, %v152
    %154 = vdwg.mxu0
    %v156 = vsel %vm121, %v117, 0
    %v159 = vsel %vm121, %v118, 0
    %v162 = vsel %vm128, %v60, 0
    %164 = vmatpush.msra.mxu0 0.0
    %165 = vmatpush.msra.mxu0 0.0
    %166 = vmatpush.msra.mxu0 0.0
    %167 = vmatpush.msra.mxu0 0.0
    %168 = vmatpush.msra.mxu0 0.0
    %169 = vmatpush.msra.mxu0 0.0
    %170 = vmatpush.msra.mxu0 0.0
    %171 = vmatpush.msra.mxu0 0.0
    %172 = vmatpush.msra.mxu0 0.0
    %173 = vmatpush.msra.mxu0 0.0
    %174 = vmatpush.msra.mxu0 0.0
    %175 = vmatpush.msra.mxu0 0.0
    %176 = vmatpush.msra.mxu0 0.0
    %177 = vmatpush.msra.mxu0 0.0
    %178 = vmatpush.msra.mxu0 0.0
    %179 = vmatpush.msra.mxu0 %v162
    %180 = vmatmul.f32.gmra.mxu0 %v156
    %v181 = vpop.f32.mrf.mxu0
    %v182 = vadd.f32 %v150, %v181
    %183 = vmatmul.f32.gmra.mxu0 %v159
    %v184 = vpop.f32.mrf.mxu0
    %v185 = vadd.f32 %v153, %v184
    %186 = vdwg.mxu0
    %v187 = vld [vmem:[%s1 + $0x20] sm:$0xff]
    %v188 = vld [vmem:[%s1 + $0x28] sm:$0xf]
    %vm189 = vcmask 15360
    %v191 = vsel %vm189, %v187, 0
    %v194 = vsel %vm189, %v188, 0
    %vm196 = vcmask 1041408
    %v198 = vsel %vm196, %v115, 0
    %200 = vmatpush.msra.mxu0 0.0
    %201 = vmatpush.msra.mxu0 0.0
    %202 = vmatpush.msra.mxu0 0.0
    %203 = vmatpush.msra.mxu0 0.0
    %204 = vmatpush.msra.mxu0 0.0
    %205 = vmatpush.msra.mxu0 0.0
    %206 = vmatpush.msra.mxu0 0.0
    %207 = vmatpush.msra.mxu0 0.0
    %208 = vmatpush.msra.mxu0 0.0
    %209 = vmatpush.msra.mxu0 0.0
    %210 = vmatpush.msra.mxu0 0.0
    %211 = vmatpush.msra.mxu0 0.0
    %212 = vmatpush.msra.mxu0 0.0
    %213 = vmatpush.msra.mxu0 0.0
    %214 = vmatpush.msra.mxu0 0.0
    %215 = vmatpush.msra.mxu0 %v198
    %216 = vmatmul.f32.gmra.mxu0 %v191
    %v217 = vpop.f32.mrf.mxu0
    %v218 = vadd.f32 0.0, %v217
    %219 = vmatmul.f32.gmra.mxu0 %v194
    %v220 = vpop.f32.mrf.mxu0
    %v221 = vadd.f32 0.0, %v220
    %222 = vdwg.mxu0
    %v223 = vadd.f32 %v182, %v218
    %v224 = vadd.f32 %v185, %v221
    %v225 = vmax.f32 %v223, 0.0
    %v226 = vmax.f32 %v224, 0.0
    %v229 = vrot.slane %v225, 6
    %v230 = vrot.slane %v226, 6
    %v231 = vsel %vm196, %v229, %v230
    %v233 = vmax.f32 %v225, %v231
    %v234 = vld [vmem:[#allocation2 + $0x48] sm:$0x7]
    %v235 = vld [vmem:[#allocation2 + $0x50] sm:$0x1]
    %v236 = vperm.slane %v235, 0
    %v238 = vsel %vm93, %v234, 0
    %240 = vmatpush.msra.mxu0 0.0
    %241 = vmatpush.msra.mxu0 0.0
    %242 = vmatpush.msra.mxu0 0.0
    %243 = vmatpush.msra.mxu0 0.0
    %244 = vmatpush.msra.mxu0 0.0
    %245 = vmatpush.msra.mxu0 0.0
    %246 = vmatpush.msra.mxu0 0.0
    %247 = vmatpush.msra.mxu0 0.0
    %248 = vmatpush.msra.mxu0 0.0
    %249 = vmatpush.msra.mxu0 0.0
    %250 = vmatpush.msra.mxu0 0.0
    %251 = vmatpush.msra.mxu0 0.0
    %252 = vmatpush.msra.mxu0 0.0
    %253 = vmatpush.msra.mxu0 0.0
    %254 = vmatpush.msra.mxu0 0.0
    %255 = vmatpush.msra.mxu0 %v238
    %256 = vmatmul.f32.gmra.mxu0 %v91
    %v257 = vpop.f32.mrf.mxu0
    %v258 = vadd.f32 %v236, %v257
    %259 = vdwg.mxu0
    %v260 = vld [vmem:[#allocation2 + $0x20] sm:$0xf]
    %v261 = vld [vmem:[#allocation2 + $0x28] sm:$0xff]
    %v262 = vld [vmem:[#allocation2 + $0x30] sm:$0xff]
    %v263 = vld [vmem:[#allocation2 + $0x38] sm:$0xff]
    %v264 = vld [vmem:[#allocation2 + $0x40] sm:$0xff]
    %vm265 = vcmask 261120
    %v267 = vsel %vm265, %v233, 0
    %269 = vmatpush.msra.mxu0 0.0
    %270 = vmatpush.msra.mxu0 0.0
    %271 = vmatpush.msra.mxu0 0.0
    %272 = vmatpush.msra.mxu0 0.0
    %273 = vmatpush.msra.mxu0 0.0
    %274 = vmatpush.msra.mxu0 0.0
    %275 = vmatpush.msra.mxu0 0.0
    %276 = vmatpush.msra.mxu0 0.0
    %277 = vmatpush.msra.mxu0 0.0
    %278 = vmatpush.msra.mxu0 0.0
    %279 = vmatpush.msra.mxu0 0.0
    %280 = vmatpush.msra.mxu0 0.0
    %281 = vmatpush.msra.mxu0 %v264
    %282 = vmatpush.msra.mxu0 %v263
    %283 = vmatpush.msra.mxu0 %v262
    %284 = vmatpush.msra.mxu0 %v261
    %285 = vmatmul.f32.gmra.mxu0 %v267
    %v286 = vpop.f32.mrf.mxu0
    %v287 = vadd.f32 0.0, %v286
    %288 = vdwg.mxu0
    %v290 = vsel %vm38, %v260, 0
    %292 = vmatpush.msra.mxu0 0.0
    %293 = vmatpush.msra.mxu0 0.0
    %294 = vmatpush.msra.mxu0 0.0
    %295 = vmatpush.msra.mxu0 0.0
    %296 = vmatpush.msra.mxu0 0.0
    %297 = vmatpush.msra.mxu0 0.0
    %298 = vmatpush.msra.mxu0 0.0
    %299 = vmatpush.msra.mxu0 0.0
    %300 = vmatpush.msra.mxu0 0.0
    %301 = vmatpush.msra.mxu0 0.0
    %302 = vmatpush.msra.mxu0 0.0
    %303 = vmatpush.msra.mxu0 0.0
    %304 = vmatpush.msra.mxu0 0.0
    %305 = vmatpush.msra.mxu0 0.0
    %306 = vmatpush.msra.mxu0 0.0
    %307 = vmatpush.msra.mxu0 %v290
    %308 = vmatmul.f32.gmra.mxu0 %v36
    %v309 = vpop.f32.mrf.mxu0
    %v310 = vadd.f32 %v287, %v309
    %311 = vdwg.mxu0
    %v312 = vld [vmem:[%s1 + $0x30] sm:$0x3f]
    %v314 = vsel %vm189, %v312, 0
    %v317 = vsel %vm196, %v258, 0
    %319 = vmatpush.msra.mxu0 0.0
    %320 = vmatpush.msra.mxu0 0.0
    %321 = vmatpush.msra.mxu0 0.0
    %322 = vmatpush.msra.mxu0 0.0
    %323 = vmatpush.msra.mxu0 0.0
    %324 = vmatpush.msra.mxu0 0.0
    %325 = vmatpush.msra.mxu0 0.0
    %326 = vmatpush.msra.mxu0 0.0
    %327 = vmatpush.msra.mxu0 0.0
    %328 = vmatpush.msra.mxu0 0.0
    %329 = vmatpush.msra.mxu0 0.0
    %330 = vmatpush.msra.mxu0 0.0
    %331 = vmatpush.msra.mxu0 0.0
    %332 = vmatpush.msra.mxu0 0.0
    %333 = vmatpush.msra.mxu0 0.0
    %334 = vmatpush.msra.mxu0 %v317
    %335 = vmatmul.f32.gmra.mxu0 %v314
    %v336 = vpop.f32.mrf.mxu0
    %v337 = vadd.f32 0.0, %v336
    %338 = vdwg.mxu0
    %v339 = vadd.f32 %v310, %v337
    %v340 = vmax.f32 %v339, 0.0
    %v342 = vrot.slane %v340, 2
    %v344 = vmax.f32 %v340, %v342
    %v345 = vrot.slane %v340, 4
    %v347 = vmax.f32 %v344, %v345
    %v348 = vld [vmem:[#allocation2 + $0x58] sm:$0xff]
    %v349 = vld [vmem:[#allocation2 + $0x60] sm:$0xff]
    %v350 = vld [vmem:[#allocation2 + $0x68] sm:$0xff]
    %v351 = vld [vmem:[#allocation2 + $0x70] sm:$0xff]
    %v352 = vld [vmem:[#allocation2 + $0x78] sm:$0x7]
    %v354 = vsel %vm93, %v352, 0
    %356 = vmatpush.msra.mxu0 0.0
    %357 = vmatpush.msra.mxu0 0.0
    %358 = vmatpush.msra.mxu0 0.0
    %359 = vmatpush.msra.mxu0 0.0
    %360 = vmatpush.msra.mxu0 0.0
    %361 = vmatpush.msra.mxu0 0.0
    %362 = vmatpush.msra.mxu0 0.0
    %363 = vmatpush.msra.mxu0 0.0
    %364 = vmatpush.msra.mxu0 0.0
    %365 = vmatpush.msra.mxu0 0.0
    %366 = vmatpush.msra.mxu0 0.0
    %367 = vmatpush.msra.mxu0 0.0
    %368 = vmatpush.msra.mxu0 0.0
    %369 = vmatpush.msra.mxu0 0.0
    %370 = vmatpush.msra.mxu0 0.0
    %371 = vmatpush.msra.mxu0 %v354
    %372 = vmatmul.f32.gmra.mxu0 %v91
    %v373 = vpop.f32.mrf.mxu0
    %v374 = vadd.f32 0.0, %v373
    %375 = vdwg.mxu0
    %v377 = vsel %vm265, %v347, 0
    %379 = vmatpush.msra.mxu0 0.0
    %380 = vmatpush.msra.mxu0 0.0
    %381 = vmatpush.msra.mxu0 0.0
    %382 = vmatpush.msra.mxu0 0.0
    %383 = vmatpush.msra.mxu0 0.0
    %384 = vmatpush.msra.mxu0 0.0
    %385 = vmatpush.msra.mxu0 0.0
    %386 = vmatpush.msra.mxu0 0.0
    %387 = vmatpush.msra.mxu0 0.0
    %388 = vmatpush.msra.mxu0 0.0
    %389 = vmatpush.msra.mxu0 0.0
    %390 = vmatpush.msra.mxu0 0.0
    %391 = vmatpush.msra.mxu0 %v351
    %392 = vmatpush.msra.mxu0 %v350
    %393 = vmatpush.msra.mxu0 %v349
    %394 = vmatpush.msra.mxu0 %v348
    %395 = vmatmul.f32.gmra.mxu0 %v377
    %v396 = vpop.f32.mrf.mxu0
    %v397 = vadd.f32 %v374, %v396
    %398 = vdwg.mxu0
    %v399 = vld [vmem:[#allocation2 + $0x80] sm:$0x1]
    %v400 = vperm.slane %v399, 0
    %v401 = vadd.f32 %v397, %v400
    %v402 = vmax.f32 %v401, 0.0
    %v403 = vld [vmem:[#allocation2 + $0x88] sm:$0xff]
    %v404 = vld [vmem:[#allocation2 + $0x90] sm:$0xff]
    %v405 = vld [vmem:[#allocation2 + $0x98] sm:$0xff]
    %v406 = vld [vmem:[#allocation2 + $0xa0] sm:$0xff]
    %v407 = vsel %vm265, %v340, 0
    %409 = vmatpush.msra.mxu0 0.0
    %410 = vmatpush.msra.mxu0 0.0
    %411 = vmatpush.msra.mxu0 0.0
    %412 = vmatpush.msra.mxu0 0.0
    %413 = vmatpush.msra.mxu0 0.0
    %414 = vmatpush.msra.mxu0 0.0
    %415 = vmatpush.msra.mxu0 0.0
    %416 = vmatpush.msra.mxu0 0.0
    %417 = vmatpush.msra.mxu0 0.0
    %418 = vmatpush.msra.mxu0 0.0
    %419 = vmatpush.msra.mxu0 0.0
    %420 = vmatpush.msra.mxu0 0.0
    %421 = vmatpush.msra.mxu0 %v406
    %422 = vmatpush.msra.mxu0 %v405
    %423 = vmatpush.msra.mxu0 %v404
    %424 = vmatpush.msra.mxu0 %v403
    %425 = vmatmul.f32.gmra.mxu0 %v407
    %v426 = vpop.f32.mrf.mxu0
    %v427 = vadd.f32 0.0, %v426
    %428 = vdwg.mxu0
    %v429 = vld [vmem:[%s1 + $0x38] sm:$0x3]
    %v430 = vld [vmem:[%s1 + $0x40] sm:$0x3f]
    %432 = vset.pattern.permute.xlu0 0
    %433 = vperm.xlu0 %432, %v427
    %v434 = vpop.permute.xlu0 %433
    %v436 = vmul.f32 %v434, %v430
    %v437 = vld [vmem:[#allocation2 + $0xa8] sm:$0xff]
    %v438 = vld [vmem:[#allocation2 + $0xb0] sm:$0xff]
    %vm439 = vcmask 130048
    %v441 = vsel %vm439, %v402, 0
    %443 = vmatpush.msra.mxu0 0.0
    %444 = vmatpush.msra.mxu0 0.0
    %445 = vmatpush.msra.mxu0 0.0
    %446 = vmatpush.msra.mxu0 0.0
    %447 = vmatpush.msra.mxu0 0.0
    %448 = vmatpush.msra.mxu0 0.0
    %449 = vmatpush.msra.mxu0 0.0
    %450 = vmatpush.msra.mxu0 0.0
    %451 = vmatpush.msra.mxu0 0.0
    %452 = vmatpush.msra.mxu0 0.0
    %453 = vmatpush.msra.mxu0 0.0
    %454 = vmatpush.msra.mxu0 0.0
    %455 = vmatpush.msra.mxu0 0.0
    %456 = vmatpush.msra.mxu0 0.0
    %457 = vmatpush.msra.mxu0 %v438
    %458 = vmatpush.msra.mxu0 %v437
    %459 = vmatmul.f32.gmra.mxu0 %v441
    %v460 = vpop.f32.mrf.mxu0
    %v461 = vadd.f32 0.0, %v460
    %462 = vdwg.mxu0
    %v464 = vsel %vm121, %v429, 0
    %v467 = vsel %vm128, %v436, 0
    %469 = vmatpush.msra.mxu0 0.0
    %470 = vmatpush.msra.mxu0 0.0
    %471 = vmatpush.msra.mxu0 0.0
    %472 = vmatpush.msra.mxu0 0.0
    %473 = vmatpush.msra.mxu0 0.0
    %474 = vmatpush.msra.mxu0 0.0
    %475 = vmatpush.msra.mxu0 0.0
    %476 = vmatpush.msra.mxu0 0.0
    %477 = vmatpush.msra.mxu0 0.0
    %478 = vmatpush.msra.mxu0 0.0
    %479 = vmatpush.msra.mxu0 0.0
    %480 = vmatpush.msra.mxu0 0.0
    %481 = vmatpush.msra.mxu0 0.0
    %482 = vmatpush.msra.mxu0 0.0
    %483 = vmatpush.msra.mxu0 0.0
    %484 = vmatpush.msra.mxu0 %v467
    %485 = vmatmul.f32.gmra.mxu0 %v464
    %v486 = vpop.f32.mrf.mxu0
    %v487 = vadd.f32 %v461, %v486
    %488 = vdwg.mxu0
    %v489 = vld [vmem:[#allocation2 + $0xb8] sm:$0x1]
    %v490 = vperm.slane %v489, 0
    %v491 = vadd.f32 %v487, %v490
    %v492 = vsel %vm196, %v491, -inf
    %493 = vmax.xlane.f32.xlu0 %v492
    %v494 = vpop.xlane.xlu0 %493
    %v495 = vsub.f32 %v491, %v494
    %v496 = vmul.f32 %v495, 1.442695
    %v497 = vpow.pop %v496
    %v498 = vsel %vm196, %v497, 0.0
    %499 = vadd.xlane.f32.xlu0 %v498
    %v500 = vpop.xlane.xlu0 %499
    %v501 = vrcp.pop %v500
    %v502 = vmul.f32 %v500, %v501
    %v503 = vsub.f32 1.0, %v502
    %v504 = vmul.f32 %v501, %v503
    %v505 = vadd.f32 %v501, %v504
    %vm506 = vweird.f32 %v500
    %vm507 = vweird.f32 %v501
    %vm508 = vmor %vm506, %vm507
    %v509 = vsel %vm508, %v501, %v505
    %v510 = vand.u32 2147483647, %v500
    %vm511 = vcmp.eq.f32.partialorder %v510, 8.507059e+37
    %v512 = vand.u32 %v500, 2147483648
    %v513 = vor.u32 1.1754944e-38, %v512
    %v514 = vsel %vm511, %v513, %v509
    %v515 = vmul.f32 %v497, %v514
    %516 = vst [vmem:[#allocation5] sm:$0x3] %v515
    // Predicated region
    $region18: #{fwd.1} parent=1 // pred_check
      _
    $region19: #{fwd.1} parent=1 // pred_check_branch
      %518 = sbr.rel (0) target = $region21
    $region20: #{fwd.1} parent=1 // pred_region
      %520 = vsyncadd [#allocation4], 0
      %s522 = sshll.u32 [#allocation5], 4
      %s523 = int_to_ptr.vmem [resolvable:$true] %s522
      %s524 = sshll.u32 %s3, 4
      %s525 = int_to_ptr.hbm [resolvable:$true] %s524
      %527 = dma.vmem_to_hbm [thread:$0]  %s523, 32, %s525, [#allocation4]
    $region21: #{fwd.1} parent=1 // pred_fallthru
      _
    // Predicated region
    $region22: #{fwd.1} parent=1 // pred_check
      _
    $region23: #{fwd.1} parent=1 // pred_check_branch
      %529 = sbr.rel (0) target = $region25
    $region24: #{fwd.1} parent=1 // pred_region
      %531 = dma.done [#allocation4], 32
    $region25: #{fwd.1} parent=1 // pred_fallthru
      _
    %532 = vsyncpa [#allocation3], 1
    %533 = vsyncpa [#allocation4], 1

</llo_original>
